<compile_context>
chip_gen: v6e
topology: v6e:2x2x1
jax: 0.10.0
libtpu: 0.0.40
codegen_flags: <defaults>
</compile_context>

<pallas_src>
import math
import functools

import jax
import jax.numpy as jnp
from jax import lax
from jax.experimental import pallas as pl
from jax.experimental.pallas import tpu as pltpu

# relation indices: 0 = parent->child, 1 = child->parent, 2 = sibling
REL_P2C, REL_C2P, REL_SIB = 0, 1, 2
# REL_TABLE[query_group][key_group] -> relation index, or None for zero block
REL_TABLE = (
    (REL_SIB, REL_C2P, None),      # queries from level-1 labels
    (REL_P2C, REL_SIB, REL_C2P),   # queries from level-2 labels
    (None,    REL_P2C, REL_SIB),   # queries from level-3 labels
)


def _round_up(x, m):
    return ((x + m - 1) // m) * m


# ---------------------------------------------------------------------------
# Kernel 1: text transform  tanh(X @ W + b)   (bf16 in, f32 acc, bf16 out)
# ---------------------------------------------------------------------------
def _text_transform_kernel(x_ref, w_ref, b_ref, o_ref):
    y = jnp.dot(x_ref[...], w_ref[...],
                preferred_element_type=jnp.float32)   # bf16 MXU, f32 accumulate
    o_ref[...] = jnp.tanh(y + b_ref[...]).astype(o_ref.dtype)


def text_transform(x, w_t, b_vec):
    n, d = x.shape
    h = w_t.shape[1]
    bm = 1024 if n >= 1024 else _round_up(n, 16)     # big M tiles, bf16-aligned
    n_p = _round_up(n, bm)
    x_p = jnp.pad(x.astype(jnp.bfloat16), ((0, n_p - n), (0, 0)))
    w_p = w_t.astype(jnp.bfloat16)
    b_p = b_vec.reshape(1, h).astype(jnp.float32)
    out = pl.pallas_call(
        _text_transform_kernel,
        out_shape=jax.ShapeDtypeStruct((n_p, h), jnp.bfloat16),  # h cols, bf16
        grid=(n_p // bm,),
        in_specs=[
            pl.BlockSpec((bm, d), lambda i: (i, 0)),
            pl.BlockSpec((d, h), lambda i: (0, 0)),
            pl.BlockSpec((1, h), lambda i: (0, 0)),
        ],
        out_specs=pl.BlockSpec((bm, h), lambda i: (i, 0)),
        compiler_params=pltpu.CompilerParams(
            dimension_semantics=("parallel",)),
    )(x_p, w_p, b_p)
    return out[:n]


# ---------------------------------------------------------------------------
# Kernel 2: all HGT label-graph layers fused into one kernel (f32, HIGHEST)
# ---------------------------------------------------------------------------
def _hgt_kernel(e_ref, wkqv_ref, pa_ref, pm_ref, wa_ref, mask_ref, o_ref, *,
                num_layers, num_heads, dh, scale, groups):
    L, H = e_ref.shape
    n1, n2, n3 = groups
    bounds = (0, n1, n1 + n2, n1 + n2 + n3)
    idx = lax.broadcasted_iota(jnp.int32, (L, 1), 0)
    row = [((idx >= bounds[g]) & (idx < bounds[g + 1])).astype(jnp.float32)
           for g in range(3)]            # (L, 1) group indicators (in-kernel)
    att_mask = mask_ref[...]             # (L, L) additive 0 / -inf mask
    Wg = [wkqv_ref[g] for g in range(3)]   # (H, 3H): [WK_g | WQ_g | WV_g]
    WAg = [wa_ref[g] for g in range(3)]    # (H, H)
    PAc = pa_ref[...]                      # (H, 3H) block-diag per relation
    PMc = pm_ref[...]                      # (H, 3H) block-diag per relation

    def mm(a, b):                          # tiny f32 matmuls: keep full precision
        return jnp.dot(a, b, preferred_element_type=jnp.float32,
                       precision=lax.Precision.HIGHEST)

    def layer(_, E):
        # mask E (one (L,H) operand) instead of the three (L,3H) results
        KQV = (mm(row[0] * E, Wg[0]) + mm(row[1] * E, Wg[1])
               + mm(row[2] * E, Wg[2]))                        # (L, 3H)
        Kf, Qf, Vf = KQV[:, 0:H], KQV[:, H:2 * H], KQV[:, 2 * H:3 * H]
        QP = mm(Qf, PAc)                 # (L, 3H): [p2c | c2p | sib]
        MSG = mm(Vf, PMc)                # (L, 3H): per-relation messages

        Kmask = [row[g] * Kf for g in range(3)]
        QPsel, Msel = [], []
        for gk in range(3):              # per key group: relation by query grp
            acc = jnp.zeros((L, H), jnp.float32)
            for gq in range(3):
                r = REL_TABLE[gq][gk]
                if r is not None:
                    acc = acc + row[gq] * QP[:, r * H:(r + 1) * H]
            QPsel.append(acc)
        for gq in range(3):              # per query group: relation by key grp
            acc = jnp.zeros((L, H), jnp.float32)
            for gk in range(3):
                r = REL_TABLE[gq][gk]
                if r is not None:
                    acc = acc + row[gk] * MSG[:, r * H:(r + 1) * H]
            Msel.append(acc)

        Z = [jnp.zeros((L, H), jnp.float32) for _ in range(3)]
        for h in range(num_heads):
            s0 = h * dh
            A = jnp.zeros((L, L), jnp.float32)
            for gk in range(3):
                A = A + lax.dot_general(
                    QPsel[gk][:, s0:s0 + dh], Kmask[gk][:, s0:s0 + dh],
                    (((1,), (1,)), ((), ())),
                    preferred_element_type=jnp.float32,
                    precision=lax.Precision.HIGHEST)
            A = A * scale + att_mask
            m = jnp.max(A, axis=1, keepdims=True)
            p = jnp.exp(A - m)
            attn = p / jnp.sum(p, axis=1, keepdims=True)   # exact (no compounding)
            out_h = jnp.zeros((L, dh), jnp.float32)
            for gq in range(3):
                out_h = out_h + row[gq] * mm(attn, Msel[gq][:, s0:s0 + dh])
            # fold the head-concatenation into row blocks of WA
            for g in range(3):
                Z[g] = Z[g] + mm(out_h, WAg[g][s0:s0 + dh, :])
        return jnp.tanh(row[0] * Z[0] + row[1] * Z[1] + row[2] * Z[2]) + E

    # fori_loop keeps the instruction stream / live ranges bounded for deep nets
    o_ref[...] = lax.fori_loop(0, num_layers, layer, e_ref[...])


def hgt_layers(E, wkqv, pa_cat, pm_cat, wa, att_mask, *, num_layers, num_heads,
               dh, groups):
    # TODO(synk): for very large L add a query-row grid axis; for the label
    # graphs this module targets, everything fits comfortably in VMEM.
    L, H = E.shape
    kernel = functools.partial(
        _hgt_kernel, num_layers=num_layers, num_heads=num_heads, dh=dh,
        scale=1.0 / math.sqrt(dh), groups=groups)
    vmem = pl.BlockSpec(memory_space=pltpu.MemorySpace.VMEM)
    return pl.pallas_call(
        kernel,
        out_shape=jax.ShapeDtypeStruct((L, H), jnp.float32),
        in_specs=[vmem] * 6,
        out_specs=vmem,
    )(E, wkqv, pa_cat, pm_cat, wa, att_mask)


# ---------------------------------------------------------------------------
# Kernel 3: label->token cross attention + pooling, batch-blocked, bf16 MXU
# ---------------------------------------------------------------------------
def _label_attn_kernel(lab_ref, text_ref, mask_ref, o_ref):
    lab = lab_ref[...]                   # (L, H)  bf16
    t = text_ref[...]                    # (bB, S, H) bf16
    bB = t.shape[0]
    lab_b = jnp.broadcast_to(lab[None, :, :], (bB,) + lab.shape)
    scores = jnp.einsum('bld,bsd->bls', lab_b, t,
                        preferred_element_type=jnp.float32)    # bf16 MXU pass
    scores = scores + mask_ref[...]      # (bB, 1, S) pad mask over all labels
    m = jnp.max(scores, axis=-1, keepdims=True)
    p = jnp.exp(scores - m)
    attn = p * pl.reciprocal(jnp.sum(p, axis=-1, keepdims=True), approx=True)
    o_ref[...] = jnp.einsum('bls,bsh->blh', attn.astype(t.dtype), t,
                            preferred_element_type=jnp.float32)  # (bB, L, H)


def label_attention_feats(label_enc, text_enc, pad_mask3):
    B, S, H = text_enc.shape
    L = label_enc.shape[0]
    # keep >=2 grid steps when B > 1 so both v7x TensorCores get work
    bB = max(1, min(16, B // 2))
    Bp = _round_up(B, bB)
    if Bp != B:
        text_enc = jnp.pad(text_enc, ((0, Bp - B), (0, 0), (0, 0)))
        pad_mask3 = jnp.pad(pad_mask3, ((0, Bp - B), (0, 0), (0, 0)))
    out = pl.pallas_call(
        _label_attn_kernel,
        out_shape=jax.ShapeDtypeStruct((Bp, L, H), jnp.float32),
        grid=(Bp // bB,),
        in_specs=[
            pl.BlockSpec((L, H), lambda b: (0, 0)),
            pl.BlockSpec((bB, S, H), lambda b: (b, 0, 0)),
            pl.BlockSpec((bB, 1, S), lambda b: (b, 0, 0)),
        ],
        out_specs=pl.BlockSpec((bB, L, H), lambda b: (b, 0, 0)),
        compiler_params=pltpu.CompilerParams(
            dimension_semantics=("parallel",)),
    )(label_enc.astype(jnp.bfloat16), text_enc, pad_mask3)
    return out[:B]


# ---------------------------------------------------------------------------
# Kernel 4: output Linear (row/K-tiled contraction, N padded to 128) + sigmoid
# ---------------------------------------------------------------------------
def _output_kernel(x_ref, w_ref, b_ref, o_ref, acc_ref):
    @pl.when(pl.program_id(1) == 0)
    def _():
        acc_ref[...] = jnp.zeros_like(acc_ref)

    acc_ref[...] += jnp.dot(x_ref[...], w_ref[...],
                            preferred_element_type=jnp.float32)

    @pl.when(pl.program_id(1) == pl.num_programs(1) - 1)
    def _():
        z = acc_ref[...] + b_ref[...]
        e = jnp.exp(-jnp.abs(z))
        o_ref[...] = jnp.where(z >= 0.0, 1.0 / (1.0 + e), e / (1.0 + e))


def output_layer(x, w, b_row, *, bn_max=256, k_chunk=2048):
    n, k = x.shape
    m = w.shape[1]
    mp = _round_up(m, 128)                       # lane-dense acc / stores
    bn = min(bn_max, _round_up(n, 16))           # row tile bounds VMEM on v7x
    n_p = _round_up(n, bn)
    kc = min(k_chunk, _round_up(k, 128))         # K chunk bounds W residency
    k_p = _round_up(k, kc)
    x_p = jnp.pad(x, ((0, n_p - n), (0, k_p - k))).astype(jnp.bfloat16)
    w_p = jnp.pad(w, ((0, k_p - k), (0, mp - m))).astype(jnp.bfloat16)
    b_p = jnp.pad(b_row, ((0, 0), (0, mp - m))).astype(jnp.float32)
    out = pl.pallas_call(
        _output_kernel,
        out_shape=jax.ShapeDtypeStruct((n_p, mp), jnp.float32),
        grid=(n_p // bn, k_p // kc),
        in_specs=[
            pl.BlockSpec((bn, kc), lambda i, kk: (i, kk)),
            pl.BlockSpec((kc, mp), lambda i, kk: (kk, 0)),
            pl.BlockSpec((1, mp), lambda i, kk: (0, 0)),
        ],
        out_specs=pl.BlockSpec((bn, mp), lambda i, kk: (i, 0)),
        scratch_shapes=[pltpu.VMEM((bn, mp), jnp.float32)],
        compiler_params=pltpu.CompilerParams(
            dimension_semantics=("parallel", "arbitrary"),
            vmem_limit_bytes=32 * 1024 * 1024),
    )(x_p, w_p, b_p)
    return out[:n, :m]


# ---------------------------------------------------------------------------
# Full forward (Pallas)
# ---------------------------------------------------------------------------
def hgt_forward_pallas(inputs, emb_table, params, cfg):
    B, S = inputs.shape
    H = cfg["hidden_dim"]
    nh = cfg["num_heads"]
    dh = H // nh
    n1, n2, n3 = cfg["num_1"], cfg["num_2"], cfg["num_3"]
    L = n1 + n2 + n3

    # TODO(synk): BertModel('bert-base-uncased') has no clean Pallas equivalent;
    # it is replaced by a deterministic embedding-table lookup -> (B, S, 768).
    emb = emb_table[inputs]                                   # (B, S, 768) bf16
    text = text_transform(emb.reshape(B * S, -1),
                          params["text_w_t"],
                          params["text_b"]).reshape(B, S, H)  # bf16

    # pack layer-invariant HGT weights once (parameter repacking, tiny)
    wkqv = jnp.concatenate([params["wk"], params["wq"], params["wv"]],
                           axis=2)                            # (3, H, 3H)
    eye = jnp.eye(nh, dtype=jnp.float32)
    pa_cat = jnp.concatenate([jnp.kron(eye, params["pa"][r]) for r in range(3)],
                             axis=1)                          # (H, 3H)
    pm_cat = jnp.concatenate([jnp.kron(eye, params["pm"][r]) for r in range(3)],
                             axis=1)                          # (H, 3H)

    E = hgt_layers(params["label_encoding"], wkqv, pa_cat, pm_cat,
                   params["wa"], params["att_mask"],
                   num_layers=cfg["num_hgt_layers"], num_heads=nh, dh=dh,
                   groups=(n1, n2, n3))

    pad = jnp.where((inputs == 0) | (inputs == 101) | (inputs == 102),
                    -jnp.inf, 0.0).astype(jnp.float32)
    feats = label_attention_feats(E, text, pad.reshape(B, 1, S))  # (B, L, H)
    return output_layer(feats.reshape(B, L * H), params["wout_t"],
                        params["bout"].reshape(1, L))


# ---------------------------------------------------------------------------
# Pure-JAX reference (literal port of the PyTorch forward) for validation
# ---------------------------------------------------------------------------
def reference_forward(inputs, emb_table, p, cfg):
    n1, n2, n3 = cfg["num_1"], cfg["num_2"], cfg["num_3"]
    H = cfg["hidden_dim"]
    nh = cfg["num_heads"]
    dh = H // nh
    scale = 1.0 / math.sqrt(dh)
    B, S = inputs.shape

    emb = emb_table[inputs]
    text = jnp.tanh(emb @ p["text_w_t"] + p["text_b"])
    E = p["label_encoding"]
    att_mask = p["att_mask"]
    WK, WQ, WV, PA, PM, WA = p["wk"], p["wq"], p["wv"], p["pa"], p["pm"], p["wa"]

    def hs(X, h):
        return X[:, h * dh:(h + 1) * dh]

    for _ in range(cfg["num_hgt_layers"]):
        E1, E2, E3 = E[:n1], E[n1:n1 + n2], E[n1 + n2:]
        K1, K2, K3 = E1 @ WK[0], E2 @ WK[1], E3 @ WK[2]
        Q1, Q2, Q3 = E1 @ WQ[0], E2 @ WQ[1], E3 @ WQ[2]
        V1, V2, V3 = E1 @ WV[0], E2 @ WV[1], E3 @ WV[2]

        M2 = []
        for h in range(nh):
            Qt = hs(Q2, h)
            A = jnp.concatenate([
                (Qt @ PA[REL_P2C]) @ hs(K1, h).T * scale,
                (Qt @ PA[REL_SIB]) @ hs(K2, h).T * scale,
                (Qt @ PA[REL_C2P]) @ hs(K3, h).T * scale], axis=1)
            Mt = jnp.concatenate([hs(V1, h) @ PM[REL_P2C],
                                  hs(V2, h) @ PM[REL_SIB],
                                  hs(V3, h) @ PM[REL_C2P]], axis=0)
            M2.append(jax.nn.softmax(A + att_mask[n1:n1 + n2, :], axis=1) @ Mt)
        M2 = jnp.concatenate(M2, axis=1) @ WA[1]

        M1 = []
        for h in range(nh):
            Qt = hs(Q1, h)
            A = jnp.concatenate([
                (Qt @ PA[REL_SIB]) @ hs(K1, h).T * scale,
                (Qt @ PA[REL_C2P]) @ hs(K2, h).T * scale,
                jnp.zeros((n1, n3), jnp.float32)], axis=1)
            Mt = jnp.concatenate([hs(V1, h) @ PM[REL_SIB],
                                  hs(V2, h) @ PM[REL_C2P],
                                  jnp.zeros((n3, dh), jnp.float32)], axis=0)
            M1.append(jax.nn.softmax(A + att_mask[:n1, :], axis=1) @ Mt)
        M1 = jnp.concatenate(M1, axis=1) @ WA[0]

        M3 = []
        for h in range(nh):
            Qt = hs(Q3, h)
            A = jnp.concatenate([
                jnp.zeros((n3, n1), jnp.float32),
                (Qt @ PA[REL_P2C]) @ hs(K2, h).T * scale,
                (Qt @ PA[REL_SIB]) @ hs(K3, h).T * scale], axis=1)
            Mt = jnp.concatenate([jnp.zeros((n1, dh), jnp.float32),
                                  hs(V2, h) @ PM[REL_P2C],
                                  hs(V3, h) @ PM[REL_SIB]], axis=0)
            M3.append(jax.nn.softmax(A + att_mask[n1 + n2:, :], axis=1) @ Mt)
        M3 = jnp.concatenate(M3, axis=1) @ WA[2]

        E = jnp.tanh(jnp.concatenate([M1, M2, M3], axis=0)) + E

    att_w = jnp.einsum("lh,bsh->bls", E, text)
    pad = jnp.where((inputs == 0) | (inputs == 101) | (inputs == 102),
                    -jnp.inf, 0.0)
    att_w = jax.nn.softmax(att_w + pad[:, None, :], axis=2)
    feats = jnp.einsum("bls,bsh->blh", att_w, text).reshape(B, -1)
    return jax.nn.sigmoid(feats @ p["wout_t"] + p["bout"])


# ---------------------------------------------------------------------------
if __name__ == "__main__":
    cfg = dict(hidden_dim=32, num_heads=4, num_1=2, num_2=3, num_3=3,
               num_hgt_layers=2)
    B, S, D, VOCAB = 2, 8, 768, 128
    H = cfg["hidden_dim"]
    nh = cfg["num_heads"]
    dh = H // nh
    n1, n2, n3 = cfg["num_1"], cfg["num_2"], cfg["num_3"]
    L = n1 + n2 + n3

    key = jax.random.PRNGKey(0)
    ks = jax.random.split(key, 16)

    def lin_t(k, in_dim, out_dim):
        bound = 1.0 / math.sqrt(in_dim)
        return jax.random.uniform(k, (in_dim, out_dim), jnp.float32,
                                  -bound, bound)

    def stack3(k, in_dim, out_dim):
        sub = jax.random.split(k, 3)
        return jnp.stack([lin_t(s, in_dim, out_dim) for s in sub])

    params = {}
    params["text_w_t"] = lin_t(ks[0], D, H)
    params["text_b"] = jax.random.uniform(ks[1], (H,), jnp.float32,
                                          -1.0 / math.sqrt(D), 1.0 / math.sqrt(D))
    params["label_encoding"] = jax.random.normal(ks[2], (L, H), jnp.float32)
    params["wk"] = stack3(ks[3], H, H)      # [WK1^T, WK2^T, WK3^T]
    params["wq"] = stack3(ks[4], H, H)
    params["wv"] = stack3(ks[5], H, H)
    params["pa"] = stack3(ks[6], dh, dh)    # [PA_p2c^T, PA_c2p^T, PA_sib^T]
    params["pm"] = stack3(ks[7], dh, dh)
    params["wa"] = stack3(ks[8], H, H)      # [WA1^T, WA2^T, WA3^T]
    params["wout_t"] = lin_t(ks[9], H * L, L)
    params["bout"] = jax.random.uniform(ks[10], (L,), jnp.float32,
                                        -1.0 / math.sqrt(H * L),
                                        1.0 / math.sqrt(H * L))

    # hierarchy attention mask (1 = allowed) -> additive 0 / -inf, like __init__
    allow = jnp.zeros((L, L), jnp.float32)
    allow = allow.at[:n1, :n1 + n2].set(1.0)      # level-1: sibs + children
    allow = allow.at[n1:n1 + n2, :].set(1.0)      # level-2: everything
    allow = allow.at[n1 + n2:, n1:].set(1.0)      # level-3: parents + sibs
    params["att_mask"] = jnp.where(allow > 0, 0.0, -jnp.inf).astype(jnp.float32)

    emb_table = 0.02 * jax.random.normal(ks[11], (VOCAB, D), jnp.float32)
    emb_table_bf16 = emb_table.astype(jnp.bfloat16)   # "stored" in bf16

    ids = jax.random.randint(ks[12], (B, S), 3, 100, dtype=jnp.int32)
    ids = ids.at[:, 0].set(101)       # [CLS]
    ids = ids.at[:, S - 2].set(102)   # [SEP]
    ids = ids.at[:, S - 1].set(0)     # [PAD]

    out = jax.block_until_ready(
        hgt_forward_pallas(ids, emb_table_bf16, params, cfg))
    with jax.default_matmul_precision("highest"):     # accurate f32 baseline
        ref = jax.block_until_ready(reference_forward(ids, emb_table, params, cfg))

    assert out.shape == (B, L), out.shape
    assert bool(jnp.all(jnp.isfinite(out)))
    assert bool(jnp.allclose(out, ref, atol=2e-3, rtol=2e-3)), (out, ref)
    print("KERNEL_OK")
</pallas_src>

<mosaic_0001>
module attributes {stable_mosaic.version = 11 : i64} {
  func.func @_text_transform_kernel(%arg0: i32, %arg1: memref<16x768xbf16, #tpu.memory_space<vmem>>, %arg2: memref<768x32xbf16, #tpu.memory_space<vmem>>, %arg3: memref<1x32xf32, #tpu.memory_space<vmem>>, %arg4: memref<16x32xbf16, #tpu.memory_space<vmem>>) attributes {dimension_semantics = [#tpu.dimension_semantics<parallel>], iteration_bounds = array<i64: 1>, scalar_prefetch = 0 : i64, scratch_operands = 0 : i64, tpu.core_type = #tpu.core_type<tc>, window_params = [{transform_indices = @transform_0, window_bounds = array<i64: 16, 768>}, {pipeline_mode = #tpu.pipeline_mode<synchronous>, transform_indices = @transform_1, window_bounds = array<i64: 768, 32>}, {pipeline_mode = #tpu.pipeline_mode<synchronous>, transform_indices = @transform_2, window_bounds = array<i64: 1, 32>}, {transform_indices = @transform_3, window_bounds = array<i64: 16, 32>}]} {
    %c0 = arith.constant 0 : index
    %c0_0 = arith.constant 0 : index
    %0 = vector.load %arg1[%c0, %c0_0] : memref<16x768xbf16, #tpu.memory_space<vmem>>, vector<16x768xbf16>
    %c0_1 = arith.constant 0 : index
    %c0_2 = arith.constant 0 : index
    %1 = vector.load %arg2[%c0_1, %c0_2] : memref<768x32xbf16, #tpu.memory_space<vmem>>, vector<768x32xbf16>
    %cst = arith.constant dense<0.000000e+00> : vector<16x32xf32>
    %2 = tpu.matmul %0, %1, %cst {dimension_numbers = #tpu.dot_dimension_numbers<[1], [0], [0], [1], [0, 0, 1, 1], [], []>} : vector<16x768xbf16>, vector<768x32xbf16>, vector<16x32xf32> -> vector<16x32xf32>
    %c0_3 = arith.constant 0 : index
    %c0_4 = arith.constant 0 : index
    %3 = vector.load %arg3[%c0_3, %c0_4] : memref<1x32xf32, #tpu.memory_space<vmem>>, vector<1x32xf32>
    %4 = vector.broadcast %3 : vector<1x32xf32> to vector<16x32xf32>
    %5 = arith.addf %2, %4 : vector<16x32xf32>
    %6 = math.tanh %5 : vector<16x32xf32>
    %7 = arith.truncf %6 : vector<16x32xf32> to vector<16x32xbf16>
    %c0_5 = arith.constant 0 : index
    %c0_6 = arith.constant 0 : index
    %8 = vector.load %arg4[%c0_5, %c0_6] : memref<16x32xbf16, #tpu.memory_space<vmem>>, vector<16x32xbf16>
    tpu.vector_store %arg4[%c0_5, %c0_6], %7 {strides = array<i32>} : memref<16x32xbf16, #tpu.memory_space<vmem>>, vector<16x32xbf16>,
    return
  }
  func.func @transform_0(%arg0: i32) -> (i32, i32) {
    %c0_i32 = arith.constant 0 : i32
    %c0_i32_0 = arith.constant 0 : i32
    return %arg0, %c0_i32 : i32, i32
  }
  func.func @transform_1(%arg0: i32) -> (i32, i32) {
    %c0_i32 = arith.constant 0 : i32
    %c0_i32_0 = arith.constant 0 : i32
    %c0_i32_1 = arith.constant 0 : i32
    return %c0_i32, %c0_i32_0 : i32, i32
  }
  func.func @transform_2(%arg0: i32) -> (i32, i32) {
    %c0_i32 = arith.constant 0 : i32
    %c0_i32_0 = arith.constant 0 : i32
    %c0_i32_1 = arith.constant 0 : i32
    return %c0_i32, %c0_i32_0 : i32, i32
  }
  func.func @transform_3(%arg0: i32) -> (i32, i32) {
    %c0_i32 = arith.constant 0 : i32
    %c0_i32_0 = arith.constant 0 : i32
    return %arg0, %c0_i32 : i32, i32
  }
}

</mosaic_0001>

<llo_original>
// kernel: tpu_custom_call.1
$region0: #{tpu_custom_call.1}
  #allocation0 [shape = 'u32[]', space=smem, size = 0x4, offset = 0x4, fixed_abs, tag = 'smem constant byte address 0x4 - core index']
  #allocation1 [shape = 'u32[144,128]{1,0:T(1,128)}', space=vmem, size = 0x12000, scoped, tag = 'internal scratch']
  %s0 = inlined_call_operand.vmem [shape: bf16[16,768], index: 0, kind: input, shape index: {}]
  %s1 = inlined_call_operand.vmem [shape: bf16[768,32], index: 1, kind: input, shape index: {}]
  %s2 = inlined_call_operand.vmem [shape: f32[1,32], index: 2, kind: input, shape index: {}]
  %s3 = inlined_call_operand.hbm [shape: bf16[16,32], index: 3, kind: output, shape index: {}]
  %s4 = sld [smem:[#allocation0]]
  $region22: #{tpu_custom_call.1} parent=0
    _
  %s6 = ssub.s32 1, %s4
  %s7 = scalar_select 0, %s6, %s4
  $region1: #{tpu_custom_call.1} parent=0
    #allocation2 [shape = 'u8[4096]{0}', space=vmem, size = 0x1000, scoped, tag = 'output window, operand 0, single buffered']
    #allocation3 [shape = 's32[1]{0}', space=sflag, size = 0x4, scoped, tag = 'scoped memory for tpu_custom_call.1']
    %8 = vsyncpa [#allocation3], 0
    // Predicated region
    $region2: #{tpu_custom_call.1} parent=1 // pred_check
      _
    $region3: #{tpu_custom_call.1} parent=1 // pred_check_branch
      %10 = sbr.rel (0) target = $region5
    $region4: #{tpu_custom_call.1} parent=1 // pred_region
      _
    $region5: #{tpu_custom_call.1} parent=1 // pred_fallthru
      _
    // Predicated region
    $region6: #{tpu_custom_call.1} parent=1 // pred_check
      _
    $region7: #{tpu_custom_call.1} parent=1 // pred_check_branch
      %12 = sbr.rel (0) target = $region9
    $region8: #{tpu_custom_call.1} parent=1 // pred_region
      _
    $region9: #{tpu_custom_call.1} parent=1 // pred_fallthru
      _
    // Predicated region
    $region10: #{tpu_custom_call.1} parent=1 // pred_check
      _
    $region11: #{tpu_custom_call.1} parent=1 // pred_check_branch
      %14 = sbr.rel (0) target = $region13
    $region12: #{tpu_custom_call.1} parent=1 // pred_region
      _
    $region13: #{tpu_custom_call.1} parent=1 // pred_fallthru
      _
    %v16 = vld [vmem:[%s0] sm:$0xff]
    %v17 = vld [vmem:[%s0 + $0x8] sm:$0xff]
    %v18 = vld [vmem:[%s0 + $0x10] sm:$0xff]
    %v19 = vld [vmem:[%s0 + $0x18] sm:$0xff]
    %v20 = vld [vmem:[%s0 + $0x20] sm:$0xff]
    %v21 = vld [vmem:[%s0 + $0x28] sm:$0xff]
    %v22 = vld [vmem:[%s1] sm:$0xf]
    %v23 = vld [vmem:[%s1 + $0x4] sm:$0xf]
    %v24 = vld [vmem:[%s1 + $0x8] sm:$0xf]
    %v25 = vld [vmem:[%s1 + $0xc] sm:$0xf]
    %v26 = vld [vmem:[%s1 + $0x10] sm:$0xf]
    %v27 = vld [vmem:[%s1 + $0x14] sm:$0xf]
    %v28 = vld [vmem:[%s1 + $0x18] sm:$0xf]
    %v29 = vld [vmem:[%s1 + $0x1c] sm:$0xf]
    %v30 = vld [vmem:[%s1 + $0x20] sm:$0xf]
    %v31 = vld [vmem:[%s1 + $0x24] sm:$0xf]
    %v32 = vld [vmem:[%s1 + $0x28] sm:$0xf]
    %v33 = vld [vmem:[%s1 + $0x2c] sm:$0xf]
    %v34 = vld [vmem:[%s1 + $0x30] sm:$0xf]
    %v35 = vld [vmem:[%s1 + $0x34] sm:$0xf]
    %v36 = vld [vmem:[%s1 + $0x38] sm:$0xf]
    %v37 = vld [vmem:[%s1 + $0x3c] sm:$0xf]
    %v38 = vld [vmem:[%s1 + $0x40] sm:$0xf]
    %v39 = vld [vmem:[%s1 + $0x44] sm:$0xf]
    %v40 = vld [vmem:[%s1 + $0x48] sm:$0xf]
    %v41 = vld [vmem:[%s1 + $0x4c] sm:$0xf]
    %v42 = vld [vmem:[%s1 + $0x50] sm:$0xf]
    %v43 = vld [vmem:[%s1 + $0x54] sm:$0xf]
    %v44 = vld [vmem:[%s1 + $0x58] sm:$0xf]
    %v45 = vld [vmem:[%s1 + $0x5c] sm:$0xf]
    %v46 = vld [vmem:[%s1 + $0x60] sm:$0xf]
    %v47 = vld [vmem:[%s1 + $0x64] sm:$0xf]
    %v48 = vld [vmem:[%s1 + $0x68] sm:$0xf]
    %v49 = vld [vmem:[%s1 + $0x6c] sm:$0xf]
    %v50 = vld [vmem:[%s1 + $0x70] sm:$0xf]
    %v51 = vld [vmem:[%s1 + $0x74] sm:$0xf]
    %v52 = vld [vmem:[%s1 + $0x78] sm:$0xf]
    %v53 = vld [vmem:[%s1 + $0x7c] sm:$0xf]
    %v54 = vld [vmem:[%s1 + $0x80] sm:$0xf]
    %v55 = vld [vmem:[%s1 + $0x84] sm:$0xf]
    %v56 = vld [vmem:[%s1 + $0x88] sm:$0xf]
    %v57 = vld [vmem:[%s1 + $0x8c] sm:$0xf]
    %v58 = vld [vmem:[%s1 + $0x90] sm:$0xf]
    %v59 = vld [vmem:[%s1 + $0x94] sm:$0xf]
    %v60 = vld [vmem:[%s1 + $0x98] sm:$0xf]
    %v61 = vld [vmem:[%s1 + $0x9c] sm:$0xf]
    %v62 = vld [vmem:[%s1 + $0xa0] sm:$0xf]
    %v63 = vld [vmem:[%s1 + $0xa4] sm:$0xf]
    %v64 = vld [vmem:[%s1 + $0xa8] sm:$0xf]
    %v65 = vld [vmem:[%s1 + $0xac] sm:$0xf]
    %v66 = vld [vmem:[%s1 + $0xb0] sm:$0xf]
    %v67 = vld [vmem:[%s1 + $0xb4] sm:$0xf]
    %v68 = vld [vmem:[%s1 + $0xb8] sm:$0xf]
    %v69 = vld [vmem:[%s1 + $0xbc] sm:$0xf]
    %v70 = vld [vmem:[%s1 + $0xc0] sm:$0xf]
    %v71 = vld [vmem:[%s1 + $0xc4] sm:$0xf]
    %v72 = vld [vmem:[%s1 + $0xc8] sm:$0xf]
    %v73 = vld [vmem:[%s1 + $0xcc] sm:$0xf]
    %v74 = vld [vmem:[%s1 + $0xd0] sm:$0xf]
    %v75 = vld [vmem:[%s1 + $0xd4] sm:$0xf]
    %v76 = vld [vmem:[%s1 + $0xd8] sm:$0xf]
    %v77 = vld [vmem:[%s1 + $0xdc] sm:$0xf]
    %v78 = vld [vmem:[%s1 + $0xe0] sm:$0xf]
    %v79 = vld [vmem:[%s1 + $0xe4] sm:$0xf]
    %v80 = vld [vmem:[%s1 + $0xe8] sm:$0xf]
    %v81 = vld [vmem:[%s1 + $0xec] sm:$0xf]
    %v82 = vld [vmem:[%s1 + $0xf0] sm:$0xf]
    %v83 = vld [vmem:[%s1 + $0xf4] sm:$0xf]
    %v84 = vld [vmem:[%s1 + $0xf8] sm:$0xf]
    %v85 = vld [vmem:[%s1 + $0xfc] sm:$0xf]
    %v86 = vld [vmem:[%s1 + $0x100] sm:$0xf]
    %v87 = vld [vmem:[%s1 + $0x104] sm:$0xf]
    %v88 = vld [vmem:[%s1 + $0x108] sm:$0xf]
    %v89 = vld [vmem:[%s1 + $0x10c] sm:$0xf]
    %v90 = vld [vmem:[%s1 + $0x110] sm:$0xf]
    %v91 = vld [vmem:[%s1 + $0x114] sm:$0xf]
    %v92 = vld [vmem:[%s1 + $0x118] sm:$0xf]
    %v93 = vld [vmem:[%s1 + $0x11c] sm:$0xf]
    %v94 = vld [vmem:[%s1 + $0x120] sm:$0xf]
    %v95 = vld [vmem:[%s1 + $0x124] sm:$0xf]
    %v96 = vld [vmem:[%s1 + $0x128] sm:$0xf]
    %v97 = vld [vmem:[%s1 + $0x12c] sm:$0xf]
    %v98 = vld [vmem:[%s1 + $0x130] sm:$0xf]
    %v99 = vld [vmem:[%s1 + $0x134] sm:$0xf]
    %v100 = vld [vmem:[%s1 + $0x138] sm:$0xf]
    %v101 = vld [vmem:[%s1 + $0x13c] sm:$0xf]
    %v102 = vld [vmem:[%s1 + $0x140] sm:$0xf]
    %v103 = vld [vmem:[%s1 + $0x144] sm:$0xf]
    %v104 = vld [vmem:[%s1 + $0x148] sm:$0xf]
    %v105 = vld [vmem:[%s1 + $0x14c] sm:$0xf]
    %v106 = vld [vmem:[%s1 + $0x150] sm:$0xf]
    %v107 = vld [vmem:[%s1 + $0x154] sm:$0xf]
    %v108 = vld [vmem:[%s1 + $0x158] sm:$0xf]
    %v109 = vld [vmem:[%s1 + $0x15c] sm:$0xf]
    %v110 = vld [vmem:[%s1 + $0x160] sm:$0xf]
    %v111 = vld [vmem:[%s1 + $0x164] sm:$0xf]
    %v112 = vld [vmem:[%s1 + $0x168] sm:$0xf]
    %v113 = vld [vmem:[%s1 + $0x16c] sm:$0xf]
    %v114 = vld [vmem:[%s1 + $0x170] sm:$0xf]
    %v115 = vld [vmem:[%s1 + $0x174] sm:$0xf]
    %v116 = vld [vmem:[%s1 + $0x178] sm:$0xf]
    %v117 = vld [vmem:[%s1 + $0x17c] sm:$0xf]
    %v118 = vld [vmem:[%s2] sm:$0x1]
    %v120 = vlaneseq
    %v121 = vshrl.u32 %v120, 7
    %v122 = vsub.s32 0, %v121
    %v123 = vrot.slane %v118, %v122
    %v131 = vunpack.c.l.b16 %v16
    %v132 = vunpack.c.h.b16 %v16
    %v133 = vunpack.c.l.b16 %v17
    %v134 = vunpack.c.h.b16 %v17
    %v135 = vunpack.c.l.b16 %v18
    %v136 = vunpack.c.h.b16 %v18
    %v137 = vunpack.c.l.b16 %v19
    %v138 = vunpack.c.h.b16 %v19
    %v139 = vunpack.c.l.b16 %v20
    %v140 = vunpack.c.h.b16 %v20
    %v141 = vunpack.c.l.b16 %v21
    %v142 = vunpack.c.h.b16 %v21
    %v143 = vpack.c.b16 %v137, %v131
    %v144 = vpack.c.b16 %v138, %v132
    %v145 = vpack.c.b16 %v139, %v133
    %v146 = vpack.c.b16 %v140, %v134
    %v147 = vpack.c.b16 %v141, %v135
    %v148 = vpack.c.b16 %v142, %v136
    %v251 = vunpack.c.l.b16 %v22
    %v252 = vunpack.c.l.b16 %v23
    %v253 = vunpack.c.l.b16 %v24
    %v254 = vunpack.c.l.b16 %v25
    %v255 = vunpack.c.l.b16 %v26
    %v256 = vunpack.c.l.b16 %v27
    %v257 = vunpack.c.l.b16 %v28
    %v258 = vunpack.c.l.b16 %v29
    %v259 = vunpack.c.l.b16 %v30
    %v260 = vunpack.c.l.b16 %v31
    %v261 = vunpack.c.l.b16 %v32
    %v262 = vunpack.c.l.b16 %v33
    %v263 = vunpack.c.l.b16 %v34
    %v264 = vunpack.c.l.b16 %v35
    %v265 = vunpack.c.l.b16 %v36
    %v266 = vunpack.c.l.b16 %v37
    %v267 = vunpack.c.l.b16 %v38
    %v268 = vunpack.c.l.b16 %v39
    %v269 = vunpack.c.l.b16 %v40
    %v270 = vunpack.c.l.b16 %v41
    %v271 = vunpack.c.l.b16 %v42
    %v272 = vunpack.c.l.b16 %v43
    %v273 = vunpack.c.l.b16 %v44
    %v274 = vunpack.c.l.b16 %v45
    %v275 = vunpack.c.l.b16 %v46
    %v276 = vunpack.c.l.b16 %v47
    %v277 = vunpack.c.l.b16 %v48
    %v278 = vunpack.c.l.b16 %v49
    %v279 = vunpack.c.l.b16 %v50
    %v280 = vunpack.c.l.b16 %v51
    %v281 = vunpack.c.l.b16 %v52
    %v282 = vunpack.c.l.b16 %v53
    %v283 = vunpack.c.l.b16 %v54
    %v284 = vunpack.c.l.b16 %v55
    %v285 = vunpack.c.l.b16 %v56
    %v286 = vunpack.c.l.b16 %v57
    %v287 = vunpack.c.l.b16 %v58
    %v288 = vunpack.c.l.b16 %v59
    %v289 = vunpack.c.l.b16 %v60
    %v290 = vunpack.c.l.b16 %v61
    %v291 = vunpack.c.l.b16 %v62
    %v292 = vunpack.c.l.b16 %v63
    %v293 = vunpack.c.l.b16 %v64
    %v294 = vunpack.c.l.b16 %v65
    %v295 = vunpack.c.l.b16 %v66
    %v296 = vunpack.c.l.b16 %v67
    %v297 = vunpack.c.l.b16 %v68
    %v298 = vunpack.c.l.b16 %v69
    %v299 = vunpack.c.l.b16 %v70
    %v300 = vunpack.c.l.b16 %v71
    %v301 = vunpack.c.l.b16 %v72
    %v302 = vunpack.c.l.b16 %v73
    %v303 = vunpack.c.l.b16 %v74
    %v304 = vunpack.c.l.b16 %v75
    %v305 = vunpack.c.l.b16 %v76
    %v306 = vunpack.c.l.b16 %v77
    %v307 = vunpack.c.l.b16 %v78
    %v308 = vunpack.c.l.b16 %v79
    %v309 = vunpack.c.l.b16 %v80
    %v310 = vunpack.c.l.b16 %v81
    %v311 = vunpack.c.l.b16 %v82
    %v312 = vunpack.c.l.b16 %v83
    %v313 = vunpack.c.l.b16 %v84
    %v314 = vunpack.c.l.b16 %v85
    %v315 = vunpack.c.l.b16 %v86
    %v316 = vunpack.c.l.b16 %v87
    %v317 = vunpack.c.l.b16 %v88
    %v318 = vunpack.c.l.b16 %v89
    %v319 = vunpack.c.l.b16 %v90
    %v320 = vunpack.c.l.b16 %v91
    %v321 = vunpack.c.l.b16 %v92
    %v322 = vunpack.c.l.b16 %v93
    %v323 = vunpack.c.l.b16 %v94
    %v324 = vunpack.c.l.b16 %v95
    %v325 = vunpack.c.l.b16 %v96
    %v326 = vunpack.c.l.b16 %v97
    %v327 = vunpack.c.l.b16 %v98
    %v328 = vunpack.c.l.b16 %v99
    %v329 = vunpack.c.l.b16 %v100
    %v330 = vunpack.c.l.b16 %v101
    %v331 = vunpack.c.l.b16 %v102
    %v332 = vunpack.c.l.b16 %v103
    %v333 = vunpack.c.l.b16 %v104
    %v334 = vunpack.c.l.b16 %v105
    %v335 = vunpack.c.l.b16 %v106
    %v336 = vunpack.c.l.b16 %v107
    %v337 = vunpack.c.l.b16 %v108
    %v338 = vunpack.c.l.b16 %v109
    %v339 = vunpack.c.l.b16 %v110
    %v340 = vunpack.c.l.b16 %v111
    %v341 = vunpack.c.l.b16 %v112
    %v342 = vunpack.c.l.b16 %v113
    %v343 = vunpack.c.l.b16 %v114
    %v344 = vunpack.c.l.b16 %v115
    %v345 = vunpack.c.l.b16 %v116
    %v346 = vunpack.c.l.b16 %v117
    %v347 = vpack.c.b16 %v252, %v251
    %v348 = vpack.c.b16 %v254, %v253
    %v349 = vpack.c.b16 %v256, %v255
    %v350 = vpack.c.b16 %v258, %v257
    %v351 = vpack.c.b16 %v260, %v259
    %v352 = vpack.c.b16 %v262, %v261
    %v353 = vpack.c.b16 %v264, %v263
    %v354 = vpack.c.b16 %v266, %v265
    %v355 = vpack.c.b16 %v268, %v267
    %v356 = vpack.c.b16 %v270, %v269
    %v357 = vpack.c.b16 %v272, %v271
    %v358 = vpack.c.b16 %v274, %v273
    %v359 = vpack.c.b16 %v276, %v275
    %v360 = vpack.c.b16 %v278, %v277
    %v361 = vpack.c.b16 %v280, %v279
    %v362 = vpack.c.b16 %v282, %v281
    %v363 = vpack.c.b16 %v284, %v283
    %v364 = vpack.c.b16 %v286, %v285
    %v365 = vpack.c.b16 %v288, %v287
    %v366 = vpack.c.b16 %v290, %v289
    %v367 = vpack.c.b16 %v292, %v291
    %v368 = vpack.c.b16 %v294, %v293
    %v369 = vpack.c.b16 %v296, %v295
    %v370 = vpack.c.b16 %v298, %v297
    %v371 = vpack.c.b16 %v300, %v299
    %v372 = vpack.c.b16 %v302, %v301
    %v373 = vpack.c.b16 %v304, %v303
    %v374 = vpack.c.b16 %v306, %v305
    %v375 = vpack.c.b16 %v308, %v307
    %v376 = vpack.c.b16 %v310, %v309
    %v377 = vpack.c.b16 %v312, %v311
    %v378 = vpack.c.b16 %v314, %v313
    %v379 = vpack.c.b16 %v316, %v315
    %v380 = vpack.c.b16 %v318, %v317
    %v381 = vpack.c.b16 %v320, %v319
    %v382 = vpack.c.b16 %v322, %v321
    %v383 = vpack.c.b16 %v324, %v323
    %v384 = vpack.c.b16 %v326, %v325
    %v385 = vpack.c.b16 %v328, %v327
    %v386 = vpack.c.b16 %v330, %v329
    %v387 = vpack.c.b16 %v332, %v331
    %v388 = vpack.c.b16 %v334, %v333
    %v389 = vpack.c.b16 %v336, %v335
    %v390 = vpack.c.b16 %v338, %v337
    %v391 = vpack.c.b16 %v340, %v339
    %v392 = vpack.c.b16 %v342, %v341
    %v393 = vpack.c.b16 %v344, %v343
    %v394 = vpack.c.b16 %v346, %v345
    %443 = vmatprep.subr.bf16.mxu0 0
    %444 = vmatpush1.bf16.msra.mxu0 %v354
    %445 = vmatprep.subr.bf16.mxu0 0
    %446 = vmatpush1.bf16.msra.mxu0 %v353
    %447 = vmatprep.subr.bf16.mxu0 0
    %448 = vmatpush1.bf16.msra.mxu0 %v352
    %449 = vmatprep.subr.bf16.mxu0 0
    %450 = vmatpush1.bf16.msra.mxu0 %v351
    %451 = vmatprep.subr.bf16.mxu0 0
    %452 = vmatpush1.bf16.msra.mxu0 %v350
    %453 = vmatprep.subr.bf16.mxu0 0
    %454 = vmatpush1.bf16.msra.mxu0 %v349
    %455 = vmatprep.subr.bf16.mxu0 0
    %456 = vmatpush1.bf16.msra.mxu0 %v348
    %457 = vmatprep.subr.bf16.mxu0 0
    %458 = vmatpush1.bf16.msra.mxu0 %v347
    %459 = vmatprep.subr.bf16.mxu0 0
    %460 = vmatpush2.bf16.msra.mxu0 %v362
    %461 = vmatprep.subr.bf16.mxu0 0
    %462 = vmatpush2.bf16.msra.mxu0 %v361
    %463 = vmatprep.subr.bf16.mxu0 0
    %464 = vmatpush2.bf16.msra.mxu0 %v360
    %465 = vmatprep.subr.bf16.mxu0 0
    %466 = vmatpush2.bf16.msra.mxu0 %v359
    %467 = vmatprep.subr.bf16.mxu0 0
    %468 = vmatpush2.bf16.msra.mxu0 %v358
    %469 = vmatprep.subr.bf16.mxu0 0
    %470 = vmatpush2.bf16.msra.mxu0 %v357
    %471 = vmatprep.subr.bf16.mxu0 0
    %472 = vmatpush2.bf16.msra.mxu0 %v356
    %473 = vmatprep.subr.bf16.mxu0 0
    %474 = vmatpush2.bf16.msra.mxu0 %v355
    %475 = vmatprep.mubr.bf16.mxu0 %v144
    %476 = vmatmul.mubr.bf16.gmra.mxu0 %v143
    %v477 = vpop.f32.mrf.mxu0
    %v478 = vadd.f32 %v123, %v477
    %v479 = vpop.f32.mrf.mxu0
    %v480 = vpop.f32.mrf.mxu0
    %v481 = vadd.f32 %v123, %v480
    %v482 = vpop.f32.mrf.mxu0
    %483 = vdwg.mxu0
    %484 = vmatprep.subr.bf16.mxu0 0
    %485 = vmatpush1.bf16.msra.mxu0 %v370
    %486 = vmatprep.subr.bf16.mxu0 0
    %487 = vmatpush1.bf16.msra.mxu0 %v369
    %488 = vmatprep.subr.bf16.mxu0 0
    %489 = vmatpush1.bf16.msra.mxu0 %v368
    %490 = vmatprep.subr.bf16.mxu0 0
    %491 = vmatpush1.bf16.msra.mxu0 %v367
    %492 = vmatprep.subr.bf16.mxu0 0
    %493 = vmatpush1.bf16.msra.mxu0 %v366
    %494 = vmatprep.subr.bf16.mxu0 0
    %495 = vmatpush1.bf16.msra.mxu0 %v365
    %496 = vmatprep.subr.bf16.mxu0 0
    %497 = vmatpush1.bf16.msra.mxu0 %v364
    %498 = vmatprep.subr.bf16.mxu0 0
    %499 = vmatpush1.bf16.msra.mxu0 %v363
    %500 = vmatprep.subr.bf16.mxu0 0
    %501 = vmatpush2.bf16.msra.mxu0 %v378
    %502 = vmatprep.subr.bf16.mxu0 0
    %503 = vmatpush2.bf16.msra.mxu0 %v377
    %504 = vmatprep.subr.bf16.mxu0 0
    %505 = vmatpush2.bf16.msra.mxu0 %v376
    %506 = vmatprep.subr.bf16.mxu0 0
    %507 = vmatpush2.bf16.msra.mxu0 %v375
    %508 = vmatprep.subr.bf16.mxu0 0
    %509 = vmatpush2.bf16.msra.mxu0 %v374
    %510 = vmatprep.subr.bf16.mxu0 0
    %511 = vmatpush2.bf16.msra.mxu0 %v373
    %512 = vmatprep.subr.bf16.mxu0 0
    %513 = vmatpush2.bf16.msra.mxu0 %v372
    %514 = vmatprep.subr.bf16.mxu0 0
    %515 = vmatpush2.bf16.msra.mxu0 %v371
    %516 = vmatprep.mubr.bf16.mxu0 %v146
    %517 = vmatmul.mubr.bf16.gmra.mxu0 %v145
    %v518 = vpop.f32.mrf.mxu0
    %v519 = vadd.f32 %v478, %v518
    %v520 = vpop.f32.mrf.mxu0
    %v521 = vpop.f32.mrf.mxu0
    %v522 = vadd.f32 %v481, %v521
    %v523 = vpop.f32.mrf.mxu0
    %524 = vdwg.mxu0
    %525 = vmatprep.subr.bf16.mxu0 0
    %526 = vmatpush1.bf16.msra.mxu0 %v386
    %527 = vmatprep.subr.bf16.mxu0 0
    %528 = vmatpush1.bf16.msra.mxu0 %v385
    %529 = vmatprep.subr.bf16.mxu0 0
    %530 = vmatpush1.bf16.msra.mxu0 %v384
    %531 = vmatprep.subr.bf16.mxu0 0
    %532 = vmatpush1.bf16.msra.mxu0 %v383
    %533 = vmatprep.subr.bf16.mxu0 0
    %534 = vmatpush1.bf16.msra.mxu0 %v382
    %535 = vmatprep.subr.bf16.mxu0 0
    %536 = vmatpush1.bf16.msra.mxu0 %v381
    %537 = vmatprep.subr.bf16.mxu0 0
    %538 = vmatpush1.bf16.msra.mxu0 %v380
    %539 = vmatprep.subr.bf16.mxu0 0
    %540 = vmatpush1.bf16.msra.mxu0 %v379
    %541 = vmatprep.subr.bf16.mxu0 0
    %542 = vmatpush2.bf16.msra.mxu0 %v394
    %543 = vmatprep.subr.bf16.mxu0 0
    %544 = vmatpush2.bf16.msra.mxu0 %v393
    %545 = vmatprep.subr.bf16.mxu0 0
    %546 = vmatpush2.bf16.msra.mxu0 %v392
    %547 = vmatprep.subr.bf16.mxu0 0
    %548 = vmatpush2.bf16.msra.mxu0 %v391
    %549 = vmatprep.subr.bf16.mxu0 0
    %550 = vmatpush2.bf16.msra.mxu0 %v390
    %551 = vmatprep.subr.bf16.mxu0 0
    %552 = vmatpush2.bf16.msra.mxu0 %v389
    %553 = vmatprep.subr.bf16.mxu0 0
    %554 = vmatpush2.bf16.msra.mxu0 %v388
    %555 = vmatprep.subr.bf16.mxu0 0
    %556 = vmatpush2.bf16.msra.mxu0 %v387
    %557 = vmatprep.mubr.bf16.mxu0 %v148
    %558 = vmatmul.mubr.bf16.gmra.mxu0 %v147
    %v559 = vpop.f32.mrf.mxu0
    %v560 = vadd.f32 %v519, %v559
    %v561 = vpop.f32.mrf.mxu0
    %v562 = vpop.f32.mrf.mxu0
    %v563 = vadd.f32 %v522, %v562
    %v564 = vpop.f32.mrf.mxu0
    %565 = vdwg.mxu0
    %v566 = vtanh.pop %v560
    %v567 = vtanh.pop %v563
    %v568 = vpack.c.bf16 %v567, %v566
    %v570 = vunpack.c.l.b16 %v568
    %v571 = vunpack.c.h.b16 %v568
    %v572 = vpack.c.b16 %v570, %v570
    %v573 = vpack.c.b16 %v571, %v571
    %vm576 = vcmask 257024
    %577 = vst.msk [vmem:[#allocation2] sm:$0xf] %vm576, %v572
    %578 = vst.msk [vmem:[#allocation2 + $0x4] sm:$0xf] %vm576, %v573
    // Predicated region
    $region14: #{tpu_custom_call.1} parent=1 // pred_check
      _
    $region15: #{tpu_custom_call.1} parent=1 // pred_check_branch
      %580 = sbr.rel (0) target = $region17
    $region16: #{tpu_custom_call.1} parent=1 // pred_region
      %s582 = ssub.s32 128, 128
      %583 = vsyncadd [#allocation3], %s582
      %s584 = sshll.u32 [#allocation2], 4
      %s585 = int_to_ptr.vmem [resolvable:$true] %s584
      %590 = dma.vmem_to_hbm [thread:$0]  %s585, 128, %s3, [#allocation3], 64, 64, 4
    $region17: #{tpu_custom_call.1} parent=1 // pred_fallthru
      _
    // Predicated region
    $region18: #{tpu_custom_call.1} parent=1 // pred_check
      _
    $region19: #{tpu_custom_call.1} parent=1 // pred_check_branch
      %592 = sbr.rel (0) target = $region21
    $region20: #{tpu_custom_call.1} parent=1 // pred_region
      %593 = dma.done [#allocation3], 128
    $region21: #{tpu_custom_call.1} parent=1 // pred_fallthru
      _
    %594 = vsyncpa [#allocation3], 1

</llo_original>
